<compile_context>
chip_gen: v7x
topology: tpu7x:2x2x1
jax: 0.10.0
libtpu: 0.0.40
codegen_flags: <defaults>
</compile_context>

<pallas_src>
import functools
import math

import jax
import jax.numpy as jnp
from jax.experimental import pallas as pl
from jax.experimental.pallas import tpu as pltpu


def _round_up(x, m):
    return ((x + m - 1) // m) * m


def _pfn_kernel(x_ref, m_ref,
                w1t_ref, b1c_ref, w2_ref, b2_ref, w3_ref, b3_ref,
                wf1_ref, bf1_ref, wf2_ref, bf2_ref, wf3_ref, bf3_ref,
                wo_ref, bo_ref,
                out_ref, *, tb, P):
    # x_ref : (C_in, tb*P) bf16 -- transposed event slab (lane-dense, contiguous DMA)
    # m_ref : (tb, P)      f32  -- 0/1 particle mask
    # out   : (tb, 128)    f32  -- lane-dense (padded classes)

    # --- phi layer 1 in the transposed domain (keeps C_in=4 input lane-dense) ---
    h1t = jnp.dot(w1t_ref[...], x_ref[...],
                  preferred_element_type=jnp.float32) + b1c_ref[...]        # (H1, N)
    h1t = jnp.maximum(h1t, 0.0)
    h = jnp.transpose(h1t, (1, 0))                                          # (N, H1) f32

    # --- phi layers 2-3: big row-major MXU matmuls in bf16, f32 accumulation ---
    h = jnp.maximum(
        jnp.dot(h.astype(jnp.bfloat16), w2_ref[...],
                preferred_element_type=jnp.float32) + b2_ref[...], 0.0)     # (N, H2)
    h = jnp.maximum(
        jnp.dot(h.astype(jnp.bfloat16), w3_ref[...],
                preferred_element_type=jnp.float32) + b3_ref[...], 0.0)     # (N, H3)

    # --- mask + particle-sum pooling: elementwise + sublane reduce (no matmul) ---
    H3 = h.shape[-1]
    hm = h.reshape(tb, P, H3) * m_ref[...][:, :, None]                      # (tb, P, H3)
    pooled = jnp.sum(hm, axis=1)                                            # (tb, H3) f32

    # --- fc head: 3x (Linear + ReLU) + output Linear, batched over tb events ---
    f = jnp.maximum(
        jnp.dot(pooled.astype(jnp.bfloat16), wf1_ref[...],
                preferred_element_type=jnp.float32) + bf1_ref[...], 0.0)
    f = jnp.maximum(
        jnp.dot(f.astype(jnp.bfloat16), wf2_ref[...],
                preferred_element_type=jnp.float32) + bf2_ref[...], 0.0)
    f = jnp.maximum(
        jnp.dot(f.astype(jnp.bfloat16), wf3_ref[...],
                preferred_element_type=jnp.float32) + bf3_ref[...], 0.0)
    out_ref[...] = jnp.dot(f.astype(jnp.bfloat16), wo_ref[...],
                           preferred_element_type=jnp.float32) + bo_ref[...]


def particle_flow_network(x_ncw, mask, params, *, tb=None):
    """x_ncw: (B, C_in, P) float32, mask: (B, 1, P). Returns (B, num_classes) f32."""
    B, C_in, P = x_ncw.shape
    num_classes = params["wo"].shape[1]
    nc_pad = _round_up(max(num_classes, 1), 128)        # lane-dense output slab

    # Alignment: tb must be a multiple of 8 (sublanes) and tb*P a multiple of 128
    # (lane-dense flattened particle axis).  align always divides 128.
    lane_req = 128 // math.gcd(P, 128)
    align = (8 * lane_req) // math.gcd(8, lane_req)      # lcm(8, lane_req)

    if tb is None:
        if B <= 2 * align:
            tb = align                                   # too small to split
        elif B <= 512:
            # 2 grid steps so both v7x TensorCores get work via "parallel"
            tb = _round_up(-(-B // 2), align)
        else:
            tb = 256                                     # ~256 events/step
    tb = max(align, _round_up(tb, align))
    n_blk = -(-B // tb)
    Bp = n_blk * tb
    N = tb * P                                           # particle rows per step

    if Bp != B:   # zero-padded events: zero mask, sliced off after the call
        x_ncw = jnp.pad(x_ncw, ((0, Bp - B), (0, 0), (0, 0)))
        mask = jnp.pad(mask, ((0, Bp - B), (0, 0), (0, 0)))

    # Transposed, lane-dense input slab: xT[c, b*P + p] = x[b, c, p]  (bf16).
    xT = jnp.transpose(x_ncw, (1, 0, 2)).reshape(C_in, Bp * P).astype(jnp.bfloat16)
    # mask.bool().float(), per-event rows (hoisted out of the kernel).
    m2 = (mask != 0).astype(jnp.float32).reshape(Bp, P)

    f32, bf16 = jnp.float32, jnp.bfloat16
    w1t = params["w1"].T.astype(bf16)                    # (H1, C_in) for transposed layer 1
    b1c = params["b1"].reshape(-1, 1).astype(f32)        # (H1, 1) column bias
    w2 = params["w2"].astype(bf16); b2 = params["b2"].astype(f32)
    w3 = params["w3"].astype(bf16); b3 = params["b3"].astype(f32)
    wf1 = params["wf1"].astype(bf16); bf1 = params["bf1"].astype(f32)
    wf2 = params["wf2"].astype(bf16); bf2 = params["bf2"].astype(f32)
    wf3 = params["wf3"].astype(bf16); bf3 = params["bf3"].astype(f32)
    # Zero-pad the output layer to nc_pad lanes -> unmasked, lane-dense stores.
    wo = jnp.zeros((params["wo"].shape[0], nc_pad), bf16).at[:, :num_classes].set(
        params["wo"].astype(bf16))
    bo = jnp.zeros((1, nc_pad), f32).at[:, :num_classes].set(params["bo"].astype(f32))

    weights = [w1t, b1c, w2, b2, w3, b3, wf1, bf1, wf2, bf2, wf3, bf3, wo, bo]

    def resident(arr):
        # Small constant-index-map tensor: DMA'd once, stays resident in VMEM.
        # TODO(synk): pipeline_mode=pl.Buffered(1) would drop the (tiny) second
        # pipeline buffer for these residents; left at default for portability.
        return pl.BlockSpec(arr.shape, lambda b: (0, 0))

    grid_spec = pltpu.PrefetchScalarGridSpec(
        num_scalar_prefetch=0,
        grid=(n_blk,),
        in_specs=[
            pl.BlockSpec((C_in, N), lambda b: (0, b)),   # (C_in, tb*P) transposed x slab
            pl.BlockSpec((tb, P), lambda b: (b, 0)),     # (tb, P) mask rows
        ] + [resident(w) for w in weights],
        out_specs=pl.BlockSpec((tb, nc_pad), lambda b: (b, 0)),
    )

    out = pl.pallas_call(
        functools.partial(_pfn_kernel, tb=tb, P=P),
        out_shape=jax.ShapeDtypeStruct((Bp, nc_pad), jnp.float32),
        grid_spec=grid_spec,
        compiler_params=pltpu.CompilerParams(
            dimension_semantics=("parallel",),
            vmem_limit_bytes=32 * 1024 * 1024),
    )(xT, m2, *weights)
    return out[:B, :num_classes]


def init_params(key, input_dims, num_classes, Phi_sizes, F_sizes):
    """Deterministic synthetic params. Conv1d(k=1)/Linear weights stored as (in, out)."""
    dims_phi = [input_dims] + list(Phi_sizes)
    dims_f = [Phi_sizes[-1]] + list(F_sizes) + [num_classes]
    params = {}
    keys = jax.random.split(key, 16)
    ki = 0
    for i in range(3):
        params[f"w{i+1}"] = 0.1 * jax.random.normal(
            keys[ki], (dims_phi[i], dims_phi[i + 1]), jnp.float32); ki += 1
        params[f"b{i+1}"] = 0.1 * jax.random.normal(
            keys[ki], (1, dims_phi[i + 1]), jnp.float32); ki += 1
    names = ["wf1", "bf1", "wf2", "bf2", "wf3", "bf3", "wo", "bo"]
    for i in range(4):
        params[names[2 * i]] = 0.1 * jax.random.normal(
            keys[ki], (dims_f[i], dims_f[i + 1]), jnp.float32); ki += 1
        params[names[2 * i + 1]] = 0.1 * jax.random.normal(
            keys[ki], (1, dims_f[i + 1]), jnp.float32); ki += 1
    return params


def reference_forward(x_ncw, mask, params):
    # pure-JAX f32 reference mirroring the PyTorch module
    h = jnp.transpose(x_ncw, (0, 2, 1))                       # (B, P, C)
    for i in range(3):
        h = jnp.maximum(h @ params[f"w{i+1}"] + params[f"b{i+1}"], 0.0)
    m = (jnp.transpose(mask, (0, 2, 1)) != 0).astype(jnp.float32)
    h = h * m
    pooled = jnp.sum(h, axis=1)                               # (B, H3)
    f = pooled
    for wn, bn in [("wf1", "bf1"), ("wf2", "bf2"), ("wf3", "bf3")]:
        f = jnp.maximum(f @ params[wn] + params[bn], 0.0)
    return f @ params["wo"] + params["bo"]


if __name__ == "__main__":
    # Small shapes consistent with the module: batch=2, input_dims=4,
    # particles=16, Phi=(32,32,64), F=(32,32,32), num_classes=8.
    B, C_in, P = 2, 4, 16
    Phi_sizes = (32, 32, 64)
    F_sizes = (32, 32, 32)
    num_classes = 8

    key = jax.random.PRNGKey(0)
    kx, km, kp = jax.random.split(key, 3)
    x = jax.random.normal(kx, (B, C_in, P), jnp.float32)
    mask = (jax.random.uniform(km, (B, 1, P)) > 0.3).astype(jnp.float32)
    params = init_params(kp, C_in, num_classes, Phi_sizes, F_sizes)

    out = particle_flow_network(x, mask, params)
    out = jax.block_until_ready(out)

    ref = reference_forward(x, mask, params)
    assert out.shape == (B, num_classes)
    # bf16 matmul operands (f32 accumulation) -> relaxed tolerance vs f32 reference
    assert jnp.allclose(out, ref, atol=3e-2, rtol=3e-2), (out, ref)
    print("KERNEL_OK")
</pallas_src>

<mosaic_0001>
module attributes {stable_mosaic.version = 11 : i64} {
  func.func @_pfn_kernel(%arg0: i32, %arg1: memref<4x128xbf16, #tpu.memory_space<vmem>>, %arg2: memref<8x16xf32, #tpu.memory_space<vmem>>, %arg3: memref<32x4xbf16, #tpu.memory_space<vmem>>, %arg4: memref<32x1xf32, #tpu.memory_space<vmem>>, %arg5: memref<32x32xbf16, #tpu.memory_space<vmem>>, %arg6: memref<1x32xf32, #tpu.memory_space<vmem>>, %arg7: memref<32x64xbf16, #tpu.memory_space<vmem>>, %arg8: memref<1x64xf32, #tpu.memory_space<vmem>>, %arg9: memref<64x32xbf16, #tpu.memory_space<vmem>>, %arg10: memref<1x32xf32, #tpu.memory_space<vmem>>, %arg11: memref<32x32xbf16, #tpu.memory_space<vmem>>, %arg12: memref<1x32xf32, #tpu.memory_space<vmem>>, %arg13: memref<32x32xbf16, #tpu.memory_space<vmem>>, %arg14: memref<1x32xf32, #tpu.memory_space<vmem>>, %arg15: memref<32x128xbf16, #tpu.memory_space<vmem>>, %arg16: memref<1x128xf32, #tpu.memory_space<vmem>>, %arg17: memref<8x128xf32, #tpu.memory_space<vmem>>) attributes {dimension_semantics = [#tpu.dimension_semantics<parallel>], iteration_bounds = array<i64: 1>, scalar_prefetch = 0 : i64, scratch_operands = 0 : i64, tpu.core_type = #tpu.core_type<tc>, window_params = [{transform_indices = @transform_0, window_bounds = array<i64: 4, 128>}, {transform_indices = @transform_1, window_bounds = array<i64: 8, 16>}, {pipeline_mode = #tpu.pipeline_mode<synchronous>, transform_indices = @transform_2, window_bounds = array<i64: 32, 4>}, {pipeline_mode = #tpu.pipeline_mode<synchronous>, transform_indices = @transform_3, window_bounds = array<i64: 32, 1>}, {pipeline_mode = #tpu.pipeline_mode<synchronous>, transform_indices = @transform_4, window_bounds = array<i64: 32, 32>}, {pipeline_mode = #tpu.pipeline_mode<synchronous>, transform_indices = @transform_5, window_bounds = array<i64: 1, 32>}, {pipeline_mode = #tpu.pipeline_mode<synchronous>, transform_indices = @transform_6, window_bounds = array<i64: 32, 64>}, {pipeline_mode = #tpu.pipeline_mode<synchronous>, transform_indices = @transform_7, window_bounds = array<i64: 1, 64>}, {pipeline_mode = #tpu.pipeline_mode<synchronous>, transform_indices = @transform_8, window_bounds = array<i64: 64, 32>}, {pipeline_mode = #tpu.pipeline_mode<synchronous>, transform_indices = @transform_9, window_bounds = array<i64: 1, 32>}, {pipeline_mode = #tpu.pipeline_mode<synchronous>, transform_indices = @transform_10, window_bounds = array<i64: 32, 32>}, {pipeline_mode = #tpu.pipeline_mode<synchronous>, transform_indices = @transform_11, window_bounds = array<i64: 1, 32>}, {pipeline_mode = #tpu.pipeline_mode<synchronous>, transform_indices = @transform_12, window_bounds = array<i64: 32, 32>}, {pipeline_mode = #tpu.pipeline_mode<synchronous>, transform_indices = @transform_13, window_bounds = array<i64: 1, 32>}, {pipeline_mode = #tpu.pipeline_mode<synchronous>, transform_indices = @transform_14, window_bounds = array<i64: 32, 128>}, {pipeline_mode = #tpu.pipeline_mode<synchronous>, transform_indices = @transform_15, window_bounds = array<i64: 1, 128>}, {transform_indices = @transform_16, window_bounds = array<i64: 8, 128>}]} {
    %c0 = arith.constant 0 : index
    %c0_0 = arith.constant 0 : index
    %0 = vector.load %arg3[%c0, %c0_0] : memref<32x4xbf16, #tpu.memory_space<vmem>>, vector<32x4xbf16>
    %c0_1 = arith.constant 0 : index
    %c0_2 = arith.constant 0 : index
    %1 = vector.load %arg1[%c0_1, %c0_2] : memref<4x128xbf16, #tpu.memory_space<vmem>>, vector<4x128xbf16>
    %cst = arith.constant dense<0.000000e+00> : vector<32x128xf32>
    %2 = tpu.matmul %0, %1, %cst {dimension_numbers = #tpu.dot_dimension_numbers<[1], [0], [0], [1], [0, 0, 1, 1], [], []>} : vector<32x4xbf16>, vector<4x128xbf16>, vector<32x128xf32> -> vector<32x128xf32>
    %c0_3 = arith.constant 0 : index
    %c0_4 = arith.constant 0 : index
    %3 = vector.load %arg4[%c0_3, %c0_4] : memref<32x1xf32, #tpu.memory_space<vmem>>, vector<32x1xf32>
    %4 = vector.broadcast %3 : vector<32x1xf32> to vector<32x128xf32>
    %5 = arith.addf %2, %4 : vector<32x128xf32>
    %cst_5 = arith.constant 0.000000e+00 : f32
    %6 = vector.broadcast %cst_5 : f32 to vector<32x128xf32>
    %7 = arith.maximumf %5, %6 : vector<32x128xf32>
    %8 = tpu.transpose %7, [1, 0] : vector<32x128xf32> -> vector<128x32xf32>
    %9 = arith.truncf %8 : vector<128x32xf32> to vector<128x32xbf16>
    %c0_6 = arith.constant 0 : index
    %c0_7 = arith.constant 0 : index
    %10 = vector.load %arg5[%c0_6, %c0_7] : memref<32x32xbf16, #tpu.memory_space<vmem>>, vector<32x32xbf16>
    %cst_8 = arith.constant dense<0.000000e+00> : vector<128x32xf32>
    %11 = tpu.matmul %9, %10, %cst_8 {dimension_numbers = #tpu.dot_dimension_numbers<[1], [0], [0], [1], [0, 0, 1, 1], [], []>} : vector<128x32xbf16>, vector<32x32xbf16>, vector<128x32xf32> -> vector<128x32xf32>
    %c0_9 = arith.constant 0 : index
    %c0_10 = arith.constant 0 : index
    %12 = vector.load %arg6[%c0_9, %c0_10] : memref<1x32xf32, #tpu.memory_space<vmem>>, vector<1x32xf32>
    %13 = vector.broadcast %12 : vector<1x32xf32> to vector<128x32xf32>
    %14 = arith.addf %11, %13 : vector<128x32xf32>
    %cst_11 = arith.constant 0.000000e+00 : f32
    %15 = vector.broadcast %cst_11 : f32 to vector<128x32xf32>
    %16 = arith.maximumf %14, %15 : vector<128x32xf32>
    %17 = arith.truncf %16 : vector<128x32xf32> to vector<128x32xbf16>
    %c0_12 = arith.constant 0 : index
    %c0_13 = arith.constant 0 : index
    %18 = vector.load %arg7[%c0_12, %c0_13] : memref<32x64xbf16, #tpu.memory_space<vmem>>, vector<32x64xbf16>
    %cst_14 = arith.constant dense<0.000000e+00> : vector<128x64xf32>
    %19 = tpu.matmul %17, %18, %cst_14 {dimension_numbers = #tpu.dot_dimension_numbers<[1], [0], [0], [1], [0, 0, 1, 1], [], []>} : vector<128x32xbf16>, vector<32x64xbf16>, vector<128x64xf32> -> vector<128x64xf32>
    %c0_15 = arith.constant 0 : index
    %c0_16 = arith.constant 0 : index
    %20 = vector.load %arg8[%c0_15, %c0_16] : memref<1x64xf32, #tpu.memory_space<vmem>>, vector<1x64xf32>
    %21 = vector.broadcast %20 : vector<1x64xf32> to vector<128x64xf32>
    %22 = arith.addf %19, %21 : vector<128x64xf32>
    %cst_17 = arith.constant 0.000000e+00 : f32
    %23 = vector.broadcast %cst_17 : f32 to vector<128x64xf32>
    %24 = arith.maximumf %22, %23 : vector<128x64xf32>
    %25 = vector.shape_cast %24 : vector<128x64xf32> to vector<8x16x64xf32>
    %c0_18 = arith.constant 0 : index
    %c0_19 = arith.constant 0 : index
    %26 = vector.load %arg2[%c0_18, %c0_19] : memref<8x16xf32, #tpu.memory_space<vmem>>, vector<8x16xf32>
    %27 = vector.shape_cast %26 : vector<8x16xf32> to vector<8x16x1xf32>
    %28 = vector.broadcast %27 : vector<8x16x1xf32> to vector<8x16x64xf32>
    %29 = arith.mulf %25, %28 : vector<8x16x64xf32>
    %cst_20 = arith.constant dense<0.000000e+00> : vector<8x64xf32>
    %30 = vector.multi_reduction <add>, %29, %cst_20 [1] : vector<8x16x64xf32> to vector<8x64xf32>
    %31 = arith.truncf %30 : vector<8x64xf32> to vector<8x64xbf16>
    %c0_21 = arith.constant 0 : index
    %c0_22 = arith.constant 0 : index
    %32 = vector.load %arg9[%c0_21, %c0_22] : memref<64x32xbf16, #tpu.memory_space<vmem>>, vector<64x32xbf16>
    %cst_23 = arith.constant dense<0.000000e+00> : vector<8x32xf32>
    %33 = tpu.matmul %31, %32, %cst_23 {dimension_numbers = #tpu.dot_dimension_numbers<[1], [0], [0], [1], [0, 0, 1, 1], [], []>} : vector<8x64xbf16>, vector<64x32xbf16>, vector<8x32xf32> -> vector<8x32xf32>
    %c0_24 = arith.constant 0 : index
    %c0_25 = arith.constant 0 : index
    %34 = vector.load %arg10[%c0_24, %c0_25] : memref<1x32xf32, #tpu.memory_space<vmem>>, vector<1x32xf32>
    %35 = vector.broadcast %34 : vector<1x32xf32> to vector<8x32xf32>
    %36 = arith.addf %33, %35 : vector<8x32xf32>
    %cst_26 = arith.constant 0.000000e+00 : f32
    %37 = vector.broadcast %cst_26 : f32 to vector<8x32xf32>
    %38 = arith.maximumf %36, %37 : vector<8x32xf32>
    %39 = arith.truncf %38 : vector<8x32xf32> to vector<8x32xbf16>
    %c0_27 = arith.constant 0 : index
    %c0_28 = arith.constant 0 : index
    %40 = vector.load %arg11[%c0_27, %c0_28] : memref<32x32xbf16, #tpu.memory_space<vmem>>, vector<32x32xbf16>
    %cst_29 = arith.constant dense<0.000000e+00> : vector<8x32xf32>
    %41 = tpu.matmul %39, %40, %cst_29 {dimension_numbers = #tpu.dot_dimension_numbers<[1], [0], [0], [1], [0, 0, 1, 1], [], []>} : vector<8x32xbf16>, vector<32x32xbf16>, vector<8x32xf32> -> vector<8x32xf32>
    %c0_30 = arith.constant 0 : index
    %c0_31 = arith.constant 0 : index
    %42 = vector.load %arg12[%c0_30, %c0_31] : memref<1x32xf32, #tpu.memory_space<vmem>>, vector<1x32xf32>
    %43 = vector.broadcast %42 : vector<1x32xf32> to vector<8x32xf32>
    %44 = arith.addf %41, %43 : vector<8x32xf32>
    %cst_32 = arith.constant 0.000000e+00 : f32
    %45 = vector.broadcast %cst_32 : f32 to vector<8x32xf32>
    %46 = arith.maximumf %44, %45 : vector<8x32xf32>
    %47 = arith.truncf %46 : vector<8x32xf32> to vector<8x32xbf16>
    %c0_33 = arith.constant 0 : index
    %c0_34 = arith.constant 0 : index
    %48 = vector.load %arg13[%c0_33, %c0_34] : memref<32x32xbf16, #tpu.memory_space<vmem>>, vector<32x32xbf16>
    %cst_35 = arith.constant dense<0.000000e+00> : vector<8x32xf32>
    %49 = tpu.matmul %47, %48, %cst_35 {dimension_numbers = #tpu.dot_dimension_numbers<[1], [0], [0], [1], [0, 0, 1, 1], [], []>} : vector<8x32xbf16>, vector<32x32xbf16>, vector<8x32xf32> -> vector<8x32xf32>
    %c0_36 = arith.constant 0 : index
    %c0_37 = arith.constant 0 : index
    %50 = vector.load %arg14[%c0_36, %c0_37] : memref<1x32xf32, #tpu.memory_space<vmem>>, vector<1x32xf32>
    %51 = vector.broadcast %50 : vector<1x32xf32> to vector<8x32xf32>
    %52 = arith.addf %49, %51 : vector<8x32xf32>
    %cst_38 = arith.constant 0.000000e+00 : f32
    %53 = vector.broadcast %cst_38 : f32 to vector<8x32xf32>
    %54 = arith.maximumf %52, %53 : vector<8x32xf32>
    %55 = arith.truncf %54 : vector<8x32xf32> to vector<8x32xbf16>
    %c0_39 = arith.constant 0 : index
    %c0_40 = arith.constant 0 : index
    %56 = vector.load %arg15[%c0_39, %c0_40] : memref<32x128xbf16, #tpu.memory_space<vmem>>, vector<32x128xbf16>
    %cst_41 = arith.constant dense<0.000000e+00> : vector<8x128xf32>
    %57 = tpu.matmul %55, %56, %cst_41 {dimension_numbers = #tpu.dot_dimension_numbers<[1], [0], [0], [1], [0, 0, 1, 1], [], []>} : vector<8x32xbf16>, vector<32x128xbf16>, vector<8x128xf32> -> vector<8x128xf32>
    %c0_42 = arith.constant 0 : index
    %c0_43 = arith.constant 0 : index
    %58 = vector.load %arg16[%c0_42, %c0_43] : memref<1x128xf32, #tpu.memory_space<vmem>>, vector<1x128xf32>
    %59 = vector.broadcast %58 : vector<1x128xf32> to vector<8x128xf32>
    %60 = arith.addf %57, %59 : vector<8x128xf32>
    %c0_44 = arith.constant 0 : index
    %c0_45 = arith.constant 0 : index
    %61 = vector.load %arg17[%c0_44, %c0_45] : memref<8x128xf32, #tpu.memory_space<vmem>>, vector<8x128xf32>
    tpu.vector_store %arg17[%c0_44, %c0_45], %60 {strides = array<i32>} : memref<8x128xf32, #tpu.memory_space<vmem>>, vector<8x128xf32>,
    return
  }
  func.func @transform_0(%arg0: i32) -> (i32, i32) {
    %c0_i32 = arith.constant 0 : i32
    %c0_i32_0 = arith.constant 0 : i32
    return %c0_i32, %arg0 : i32, i32
  }
  func.func @transform_1(%arg0: i32) -> (i32, i32) {
    %c0_i32 = arith.constant 0 : i32
    %c0_i32_0 = arith.constant 0 : i32
    return %arg0, %c0_i32 : i32, i32
  }
  func.func @transform_2(%arg0: i32) -> (i32, i32) {
    %c0_i32 = arith.constant 0 : i32
    %c0_i32_0 = arith.constant 0 : i32
    %c0_i32_1 = arith.constant 0 : i32
    return %c0_i32, %c0_i32_0 : i32, i32
  }
  func.func @transform_3(%arg0: i32) -> (i32, i32) {
    %c0_i32 = arith.constant 0 : i32
    %c0_i32_0 = arith.constant 0 : i32
    %c0_i32_1 = arith.constant 0 : i32
    return %c0_i32, %c0_i32_0 : i32, i32
  }
  func.func @transform_4(%arg0: i32) -> (i32, i32) {
    %c0_i32 = arith.constant 0 : i32
    %c0_i32_0 = arith.constant 0 : i32
    %c0_i32_1 = arith.constant 0 : i32
    return %c0_i32, %c0_i32_0 : i32, i32
  }
  func.func @transform_5(%arg0: i32) -> (i32, i32) {
    %c0_i32 = arith.constant 0 : i32
    %c0_i32_0 = arith.constant 0 : i32
    %c0_i32_1 = arith.constant 0 : i32
    return %c0_i32, %c0_i32_0 : i32, i32
  }
  func.func @transform_6(%arg0: i32) -> (i32, i32) {
    %c0_i32 = arith.constant 0 : i32
    %c0_i32_0 = arith.constant 0 : i32
    %c0_i32_1 = arith.constant 0 : i32
    return %c0_i32, %c0_i32_0 : i32, i32
  }
  func.func @transform_7(%arg0: i32) -> (i32, i32) {
    %c0_i32 = arith.constant 0 : i32
    %c0_i32_0 = arith.constant 0 : i32
    %c0_i32_1 = arith.constant 0 : i32
    return %c0_i32, %c0_i32_0 : i32, i32
  }
  func.func @transform_8(%arg0: i32) -> (i32, i32) {
    %c0_i32 = arith.constant 0 : i32
    %c0_i32_0 = arith.constant 0 : i32
    %c0_i32_1 = arith.constant 0 : i32
    return %c0_i32, %c0_i32_0 : i32, i32
  }
  func.func @transform_9(%arg0: i32) -> (i32, i32) {
    %c0_i32 = arith.constant 0 : i32
    %c0_i32_0 = arith.constant 0 : i32
    %c0_i32_1 = arith.constant 0 : i32
    return %c0_i32, %c0_i32_0 : i32, i32
  }
  func.func @transform_10(%arg0: i32) -> (i32, i32) {
    %c0_i32 = arith.constant 0 : i32
    %c0_i32_0 = arith.constant 0 : i32
    %c0_i32_1 = arith.constant 0 : i32
    return %c0_i32, %c0_i32_0 : i32, i32
  }
  func.func @transform_11(%arg0: i32) -> (i32, i32) {
    %c0_i32 = arith.constant 0 : i32
    %c0_i32_0 = arith.constant 0 : i32
    %c0_i32_1 = arith.constant 0 : i32
    return %c0_i32, %c0_i32_0 : i32, i32
  }
  func.func @transform_12(%arg0: i32) -> (i32, i32) {
    %c0_i32 = arith.constant 0 : i32
    %c0_i32_0 = arith.constant 0 : i32
    %c0_i32_1 = arith.constant 0 : i32
    return %c0_i32, %c0_i32_0 : i32, i32
  }
  func.func @transform_13(%arg0: i32) -> (i32, i32) {
    %c0_i32 = arith.constant 0 : i32
    %c0_i32_0 = arith.constant 0 : i32
    %c0_i32_1 = arith.constant 0 : i32
    return %c0_i32, %c0_i32_0 : i32, i32
  }
  func.func @transform_14(%arg0: i32) -> (i32, i32) {
    %c0_i32 = arith.constant 0 : i32
    %c0_i32_0 = arith.constant 0 : i32
    %c0_i32_1 = arith.constant 0 : i32
    return %c0_i32, %c0_i32_0 : i32, i32
  }
  func.func @transform_15(%arg0: i32) -> (i32, i32) {
    %c0_i32 = arith.constant 0 : i32
    %c0_i32_0 = arith.constant 0 : i32
    %c0_i32_1 = arith.constant 0 : i32
    return %c0_i32, %c0_i32_0 : i32, i32
  }
  func.func @transform_16(%arg0: i32) -> (i32, i32) {
    %c0_i32 = arith.constant 0 : i32
    %c0_i32_0 = arith.constant 0 : i32
    return %arg0, %c0_i32 : i32, i32
  }
}

</mosaic_0001>

<llo_original>
// kernel: tpu_custom_call.1
$region0: #{tpu_custom_call.1}
  #allocation0 [shape = 'u32[]', space=smem, size = 0x4, offset = 0x4, fixed_abs, tag = 'smem constant byte address 0x4 - core index']
  #allocation1 [shape = 'u32[144,128]{1,0:T(1,128)}', space=vmem, size = 0x12000, scoped, tag = 'internal scratch']
  %s0 = inlined_call_operand.vmem [shape: bf16[4,128], index: 0, kind: input, shape index: {}]
  %s1 = inlined_call_operand.hbm [shape: f32[8,16], index: 1, kind: input, shape index: {}]
  %s2 = inlined_call_operand.vmem [shape: bf16[32,4], index: 2, kind: input, shape index: {}]
  %s3 = inlined_call_operand.vmem [shape: f32[32,1], index: 3, kind: input, shape index: {}]
  %s4 = inlined_call_operand.vmem [shape: bf16[32,32], index: 4, kind: input, shape index: {}]
  %s5 = inlined_call_operand.vmem [shape: f32[1,32], index: 5, kind: input, shape index: {}]
  %s6 = inlined_call_operand.vmem [shape: bf16[32,64], index: 6, kind: input, shape index: {}]
  %s7 = inlined_call_operand.vmem [shape: f32[1,64], index: 7, kind: input, shape index: {}]
  %s8 = inlined_call_operand.vmem [shape: bf16[64,32], index: 8, kind: input, shape index: {}]
  %s9 = inlined_call_operand.vmem [shape: f32[1,32], index: 9, kind: input, shape index: {}]
  %s10 = inlined_call_operand.vmem [shape: bf16[32,32], index: 10, kind: input, shape index: {}]
  %s11 = inlined_call_operand.vmem [shape: f32[1,32], index: 11, kind: input, shape index: {}]
  %s12 = inlined_call_operand.vmem [shape: bf16[32,32], index: 12, kind: input, shape index: {}]
  %s13 = inlined_call_operand.vmem [shape: f32[1,32], index: 13, kind: input, shape index: {}]
  %s14 = inlined_call_operand.vmem [shape: bf16[32,128], index: 14, kind: input, shape index: {}]
  %s15 = inlined_call_operand.vmem [shape: f32[1,128], index: 15, kind: input, shape index: {}]
  %s16 = inlined_call_operand.hbm [shape: f32[8,128], index: 16, kind: output, shape index: {}]
  %s17 = sld [smem:[#allocation0]]
  $region78: #{tpu_custom_call.1} parent=0
    _
  %s19 = ssub.s32 1, %s17
  %s20 = scalar_select 0, %s19, %s17
  $region1: #{tpu_custom_call.1} parent=0
    #allocation2 [shape = 'u8[4096]{0}', space=vmem, size = 0x1000, scoped, tag = 'input window, operand 1, single buffered']
    #allocation3 [shape = 's32[1]{0}', space=sflag, size = 0x4, scoped, tag = 'scoped memory for tpu_custom_call.1']
    #allocation4 [shape = 's32[1]{0}', space=sflag, size = 0x4, scoped, tag = 'scoped memory for tpu_custom_call.1']
    #allocation5 [shape = 'u8[4096]{0}', space=vmem, size = 0x1000, scoped, tag = 'output window, operand 0, single buffered']
    %21 = vsyncpa [#allocation3], 0
    %22 = vsyncpa [#allocation4], 0
    // Predicated region
    $region2: #{tpu_custom_call.1} parent=1 // pred_check
      _
    $region3: #{tpu_custom_call.1} parent=1 // pred_check_branch
      %24 = sbr.rel (0) target = $region5
    $region4: #{tpu_custom_call.1} parent=1 // pred_region
      _
    $region5: #{tpu_custom_call.1} parent=1 // pred_fallthru
      _
    // Predicated region
    $region6: #{tpu_custom_call.1} parent=1 // pred_check
      _
    $region7: #{tpu_custom_call.1} parent=1 // pred_check_branch
      %26 = sbr.rel (0) target = $region9
    $region8: #{tpu_custom_call.1} parent=1 // pred_region
      %s28 = ssub.s32 128, 128
      %29 = vsyncadd [#allocation3], %s28
      %s31 = sshll.u32 [#allocation2], 4
      %s32 = int_to_ptr.vmem [resolvable:$true] %s31
      %34 = dma.hbm_to_vmem [thread:$0]  %s1, 128, %s32, [#allocation3]
    $region9: #{tpu_custom_call.1} parent=1 // pred_fallthru
      _
    // Predicated region
    $region10: #{tpu_custom_call.1} parent=1 // pred_check
      _
    $region11: #{tpu_custom_call.1} parent=1 // pred_check_branch
      %36 = sbr.rel (0) target = $region13
    $region12: #{tpu_custom_call.1} parent=1 // pred_region
      _
    $region13: #{tpu_custom_call.1} parent=1 // pred_fallthru
      _
    // Predicated region
    $region14: #{tpu_custom_call.1} parent=1 // pred_check
      _
    $region15: #{tpu_custom_call.1} parent=1 // pred_check_branch
      %38 = sbr.rel (0) target = $region17
    $region16: #{tpu_custom_call.1} parent=1 // pred_region
      _
    $region17: #{tpu_custom_call.1} parent=1 // pred_fallthru
      _
    // Predicated region
    $region18: #{tpu_custom_call.1} parent=1 // pred_check
      _
    $region19: #{tpu_custom_call.1} parent=1 // pred_check_branch
      %40 = sbr.rel (0) target = $region21
    $region20: #{tpu_custom_call.1} parent=1 // pred_region
      _
    $region21: #{tpu_custom_call.1} parent=1 // pred_fallthru
      _
    // Predicated region
    $region22: #{tpu_custom_call.1} parent=1 // pred_check
      _
    $region23: #{tpu_custom_call.1} parent=1 // pred_check_branch
      %42 = sbr.rel (0) target = $region25
    $region24: #{tpu_custom_call.1} parent=1 // pred_region
      _
    $region25: #{tpu_custom_call.1} parent=1 // pred_fallthru
      _
    // Predicated region
    $region26: #{tpu_custom_call.1} parent=1 // pred_check
      _
    $region27: #{tpu_custom_call.1} parent=1 // pred_check_branch
      %44 = sbr.rel (0) target = $region29
    $region28: #{tpu_custom_call.1} parent=1 // pred_region
      _
    $region29: #{tpu_custom_call.1} parent=1 // pred_fallthru
      _
    // Predicated region
    $region30: #{tpu_custom_call.1} parent=1 // pred_check
      _
    $region31: #{tpu_custom_call.1} parent=1 // pred_check_branch
      %46 = sbr.rel (0) target = $region33
    $region32: #{tpu_custom_call.1} parent=1 // pred_region
      _
    $region33: #{tpu_custom_call.1} parent=1 // pred_fallthru
      _
    // Predicated region
    $region34: #{tpu_custom_call.1} parent=1 // pred_check
      _
    $region35: #{tpu_custom_call.1} parent=1 // pred_check_branch
      %48 = sbr.rel (0) target = $region37
    $region36: #{tpu_custom_call.1} parent=1 // pred_region
      _
    $region37: #{tpu_custom_call.1} parent=1 // pred_fallthru
      _
    // Predicated region
    $region38: #{tpu_custom_call.1} parent=1 // pred_check
      _
    $region39: #{tpu_custom_call.1} parent=1 // pred_check_branch
      %50 = sbr.rel (0) target = $region41
    $region40: #{tpu_custom_call.1} parent=1 // pred_region
      _
    $region41: #{tpu_custom_call.1} parent=1 // pred_fallthru
      _
    // Predicated region
    $region42: #{tpu_custom_call.1} parent=1 // pred_check
      _
    $region43: #{tpu_custom_call.1} parent=1 // pred_check_branch
      %52 = sbr.rel (0) target = $region45
    $region44: #{tpu_custom_call.1} parent=1 // pred_region
      _
    $region45: #{tpu_custom_call.1} parent=1 // pred_fallthru
      _
    // Predicated region
    $region46: #{tpu_custom_call.1} parent=1 // pred_check
      _
    $region47: #{tpu_custom_call.1} parent=1 // pred_check_branch
      %54 = sbr.rel (0) target = $region49
    $region48: #{tpu_custom_call.1} parent=1 // pred_region
      _
    $region49: #{tpu_custom_call.1} parent=1 // pred_fallthru
      _
    // Predicated region
    $region50: #{tpu_custom_call.1} parent=1 // pred_check
      _
    $region51: #{tpu_custom_call.1} parent=1 // pred_check_branch
      %56 = sbr.rel (0) target = $region53
    $region52: #{tpu_custom_call.1} parent=1 // pred_region
      _
    $region53: #{tpu_custom_call.1} parent=1 // pred_fallthru
      _
    // Predicated region
    $region54: #{tpu_custom_call.1} parent=1 // pred_check
      _
    $region55: #{tpu_custom_call.1} parent=1 // pred_check_branch
      %58 = sbr.rel (0) target = $region57
    $region56: #{tpu_custom_call.1} parent=1 // pred_region
      _
    $region57: #{tpu_custom_call.1} parent=1 // pred_fallthru
      _
    // Predicated region
    $region58: #{tpu_custom_call.1} parent=1 // pred_check
      _
    $region59: #{tpu_custom_call.1} parent=1 // pred_check_branch
      %60 = sbr.rel (0) target = $region61
    $region60: #{tpu_custom_call.1} parent=1 // pred_region
      _
    $region61: #{tpu_custom_call.1} parent=1 // pred_fallthru
      _
    // Predicated region
    $region62: #{tpu_custom_call.1} parent=1 // pred_check
      _
    $region63: #{tpu_custom_call.1} parent=1 // pred_check_branch
      %62 = sbr.rel (0) target = $region65
    $region64: #{tpu_custom_call.1} parent=1 // pred_region
      _
    $region65: #{tpu_custom_call.1} parent=1 // pred_fallthru
      _
    // Predicated region
    $region66: #{tpu_custom_call.1} parent=1 // pred_check
      _
    $region67: #{tpu_custom_call.1} parent=1 // pred_check_branch
      %64 = sbr.rel (0) target = $region69
    $region68: #{tpu_custom_call.1} parent=1 // pred_region
      %65 = dma.done [#allocation3], 128
    $region69: #{tpu_custom_call.1} parent=1 // pred_fallthru
      _
    %v67 = vld [vmem:[%s2] sm:$0xf]
    %v68 = vld [vmem:[%s2 + $0x4] sm:$0xf]
    %v69 = vld [vmem:[%s2 + $0x8] sm:$0xf]
    %v70 = vld [vmem:[%s2 + $0xc] sm:$0xf]
    %v71 = vld [vmem:[%s0] sm:$0x3]
    %v72 = vld [vmem:[%s3] sm:$0xff]
    %v73 = vld [vmem:[%s3 + $0x8] sm:$0xff]
    %v74 = vld [vmem:[%s3 + $0x10] sm:$0xff]
    %v75 = vld [vmem:[%s3 + $0x18] sm:$0xff]
    %77 = vset.pattern.permute.xlu0 0
    %78 = vperm.xlu0 %77, %v72
    %v79 = vpop.permute.xlu0 %78
    %82 = vset.pattern.permute.xlu0 0
    %83 = vperm.xlu0 %82, %v73
    %v84 = vpop.permute.xlu0 %83
    %87 = vset.pattern.permute.xlu0 0
    %88 = vperm.xlu0 %87, %v74
    %v89 = vpop.permute.xlu0 %88
    %92 = vset.pattern.permute.xlu0 0
    %93 = vperm.xlu0 %92, %v75
    %v94 = vpop.permute.xlu0 %93
    %v100 = vunpack.c.l.b16 %v67
    %v101 = vunpack.c.l.b16 %v68
    %v102 = vunpack.c.l.b16 %v69
    %v103 = vunpack.c.l.b16 %v70
    %v104 = vpack.c.b16 %v101, %v100
    %v105 = vpack.c.b16 %v103, %v102
    %vm106 = vcmask 31744
    %v108 = vsel %vm106, %v104, 0
    %v111 = vsel %vm106, %v105, 0
    %vm113 = vcmask 1041408
    %v115 = vsel %vm113, %v71, 0
    %117 = vmatprep.subr.bf16.mxu0 0
    %118 = vmatpush1.bf16.msra.mxu0 %v115
    %119 = vmatprep.subr.bf16.mxu0 0
    %120 = vmatpush1.bf16.msra.mxu0 0
    %121 = vmatprep.subr.bf16.mxu0 0
    %122 = vmatpush1.bf16.msra.mxu0 0
    %123 = vmatprep.subr.bf16.mxu0 0
    %124 = vmatpush1.bf16.msra.mxu0 0
    %125 = vmatprep.subr.bf16.mxu0 0
    %126 = vmatpush1.bf16.msra.mxu0 0
    %127 = vmatprep.subr.bf16.mxu0 0
    %128 = vmatpush1.bf16.msra.mxu0 0
    %129 = vmatprep.subr.bf16.mxu0 0
    %130 = vmatpush1.bf16.msra.mxu0 0
    %131 = vmatprep.subr.bf16.mxu0 0
    %132 = vmatpush1.bf16.msra.mxu0 0
    %133 = vmatprep.subr.bf16.mxu0 0
    %134 = vmatpush1.bf16.msra.mxu0 0
    %135 = vmatprep.subr.bf16.mxu0 0
    %136 = vmatpush1.bf16.msra.mxu0 0
    %137 = vmatprep.subr.bf16.mxu0 0
    %138 = vmatpush1.bf16.msra.mxu0 0
    %139 = vmatprep.subr.bf16.mxu0 0
    %140 = vmatpush1.bf16.msra.mxu0 0
    %141 = vmatprep.subr.bf16.mxu0 0
    %142 = vmatpush1.bf16.msra.mxu0 0
    %143 = vmatprep.subr.bf16.mxu0 0
    %144 = vmatpush1.bf16.msra.mxu0 0
    %145 = vmatprep.subr.bf16.mxu0 0
    %146 = vmatpush1.bf16.msra.mxu0 0
    %147 = vmatprep.subr.bf16.mxu0 0
    %148 = vmatpush1.bf16.msra.mxu0 0
    %149 = vmatprep.mubr.bf16.mxu0 0
    %150 = vmatmul.mubr.bf16.gmra.mrb[0].mxu0 %v108
    %v151 = vpop.f32.mrb[0].mxu0
    %v152 = vadd.f32 %v79, %v151
    %v153 = vpop.f32.mrb[0].mxu0
    %v154 = vpop.f32.mrb[0].mxu0
    %v155 = vadd.f32 %v84, %v154
    %v156 = vpop.f32.mrb[0].mxu0
    %157 = vmatprep.mubr.bf16.mxu0 0
    %158 = vmatmul.mubr.bf16.gmra.mrb[0].mxu0 %v111
    %v159 = vpop.f32.mrb[0].mxu0
    %v160 = vadd.f32 %v89, %v159
    %v161 = vpop.f32.mrb[0].mxu0
    %v162 = vpop.f32.mrb[0].mxu0
    %v163 = vadd.f32 %v94, %v162
    %v164 = vpop.f32.mrb[0].mxu0
    %165 = vdwg.mxu0
    %v166 = vmax.f32 %v152, 0.0
    %v167 = vmax.f32 %v155, 0.0
    %v168 = vmax.f32 %v160, 0.0
    %v169 = vmax.f32 %v163, 0.0
    %170 = vxpose.xlu0.b32.start [1/16] %v166, 128
    %171 = vxpose.xlu0.b32.cont [2/16] %v167, 128
    %172 = vxpose.xlu0.b32.cont [3/16] %v168, 128
    %173 = vxpose.xlu0.b32.cont [4/16] %v169, 128
    %174 = vxpose.xlu0.b32.cont [5/16] 0.0, 128
    %175 = vxpose.xlu0.b32.cont [6/16] 0.0, 128
    %176 = vxpose.xlu0.b32.cont [7/16] 0.0, 128
    %177 = vxpose.xlu0.b32.cont [8/16] 0.0, 128
    %178 = vxpose.xlu0.b32.cont [9/16] 0.0, 128
    %179 = vxpose.xlu0.b32.cont [10/16] 0.0, 128
    %180 = vxpose.xlu0.b32.cont [11/16] 0.0, 128
    %181 = vxpose.xlu0.b32.cont [12/16] 0.0, 128
    %182 = vxpose.xlu0.b32.cont [13/16] 0.0, 128
    %183 = vxpose.xlu0.b32.cont [14/16] 0.0, 128
    %184 = vxpose.xlu0.b32.cont [15/16] 0.0, 128
    %185 = vxpose.xlu0.b32.end [16/16] 0.0, 128
    %v186 = vpop.trf.xlu0
    %v187 = vpop.trf.xlu0
    %v188 = vpop.trf.xlu0
    %v189 = vpop.trf.xlu0
    %v190 = vpop.trf.xlu0
    %v191 = vpop.trf.xlu0
    %v192 = vpop.trf.xlu0
    %v193 = vpop.trf.xlu0
    %v194 = vpop.trf.xlu0
    %v195 = vpop.trf.xlu0
    %v196 = vpop.trf.xlu0
    %v197 = vpop.trf.xlu0
    %v198 = vpop.trf.xlu0
    %v199 = vpop.trf.xlu0
    %v200 = vpop.trf.xlu0
    %v201 = vpop.trf.xlu0
    %v202 = vpack.c.bf16 %v187, %v186
    %v203 = vpack.c.bf16 %v189, %v188
    %v204 = vpack.c.bf16 %v191, %v190
    %v205 = vpack.c.bf16 %v193, %v192
    %v206 = vpack.c.bf16 %v195, %v194
    %v207 = vpack.c.bf16 %v197, %v196
    %v208 = vpack.c.bf16 %v199, %v198
    %v209 = vpack.c.bf16 %v201, %v200
    %v210 = vld [vmem:[%s4] sm:$0xf]
    %v211 = vld [vmem:[%s4 + $0x4] sm:$0xf]
    %v212 = vld [vmem:[%s4 + $0x8] sm:$0xf]
    %v213 = vld [vmem:[%s4 + $0xc] sm:$0xf]
    %v214 = vld [vmem:[%s5] sm:$0x1]
    %v216 = vlaneseq
    %v217 = vshrl.u32 %v216, 7
    %v218 = vsub.s32 0, %v217
    %v219 = vrot.slane %v214, %v218
    %v225 = vunpack.c.l.b16 %v210
    %v226 = vunpack.c.l.b16 %v211
    %v227 = vunpack.c.l.b16 %v212
    %v228 = vunpack.c.l.b16 %v213
    %v229 = vpack.c.b16 %v226, %v225
    %v230 = vpack.c.b16 %v228, %v227
    %vm233 = vcmask 261120
    %v235 = vsel %vm233, %v202, 0
    %v238 = vsel %vm233, %v203, 0
    %v241 = vsel %vm233, %v204, 0
    %v244 = vsel %vm233, %v205, 0
    %v247 = vsel %vm233, %v206, 0
    %v250 = vsel %vm233, %v207, 0
    %v253 = vsel %vm233, %v208, 0
    %v256 = vsel %vm233, %v209, 0
    %258 = vmatprep.subr.bf16.mxu0 0
    %259 = vmatpush1.bf16.msra.mxu0 %v229
    %260 = vmatprep.subr.bf16.mxu0 0
    %261 = vmatpush1.bf16.msra.mxu0 %v230
    %262 = vmatprep.subr.bf16.mxu0 0
    %263 = vmatpush1.bf16.msra.mxu0 0
    %264 = vmatprep.subr.bf16.mxu0 0
    %265 = vmatpush1.bf16.msra.mxu0 0
    %266 = vmatprep.subr.bf16.mxu0 0
    %267 = vmatpush1.bf16.msra.mxu0 0
    %268 = vmatprep.subr.bf16.mxu0 0
    %269 = vmatpush1.bf16.msra.mxu0 0
    %270 = vmatprep.subr.bf16.mxu0 0
    %271 = vmatpush1.bf16.msra.mxu0 0
    %272 = vmatprep.subr.bf16.mxu0 0
    %273 = vmatpush1.bf16.msra.mxu0 0
    %274 = vmatprep.subr.bf16.mxu0 0
    %275 = vmatpush1.bf16.msra.mxu0 0
    %276 = vmatprep.subr.bf16.mxu0 0
    %277 = vmatpush1.bf16.msra.mxu0 0
    %278 = vmatprep.subr.bf16.mxu0 0
    %279 = vmatpush1.bf16.msra.mxu0 0
    %280 = vmatprep.subr.bf16.mxu0 0
    %281 = vmatpush1.bf16.msra.mxu0 0
    %282 = vmatprep.subr.bf16.mxu0 0
    %283 = vmatpush1.bf16.msra.mxu0 0
    %284 = vmatprep.subr.bf16.mxu0 0
    %285 = vmatpush1.bf16.msra.mxu0 0
    %286 = vmatprep.subr.bf16.mxu0 0
    %287 = vmatpush1.bf16.msra.mxu0 0
    %288 = vmatprep.subr.bf16.mxu0 0
    %289 = vmatpush1.bf16.msra.mxu0 0
    %290 = vmatprep.mubr.bf16.mxu0 0
    %291 = vmatmul.mubr.bf16.gmra.mrb[0].mxu0 %v235
    %v292 = vpop.f32.mrb[0].mxu0
    %v293 = vadd.f32 %v219, %v292
    %v294 = vpop.f32.mrb[0].mxu0
    %v295 = vpop.f32.mrb[0].mxu0
    %v296 = vadd.f32 %v219, %v295
    %v297 = vpop.f32.mrb[0].mxu0
    %298 = vmatprep.mubr.bf16.mxu0 0
    %299 = vmatmul.mubr.bf16.gmra.mrb[0].mxu0 %v238
    %v300 = vpop.f32.mrb[0].mxu0
    %v301 = vadd.f32 %v219, %v300
    %v302 = vpop.f32.mrb[0].mxu0
    %v303 = vpop.f32.mrb[0].mxu0
    %v304 = vadd.f32 %v219, %v303
    %v305 = vpop.f32.mrb[0].mxu0
    %306 = vmatprep.mubr.bf16.mxu0 0
    %307 = vmatmul.mubr.bf16.gmra.mrb[0].mxu0 %v241
    %v308 = vpop.f32.mrb[0].mxu0
    %v309 = vadd.f32 %v219, %v308
    %v310 = vpop.f32.mrb[0].mxu0
    %v311 = vpop.f32.mrb[0].mxu0
    %v312 = vadd.f32 %v219, %v311
    %v313 = vpop.f32.mrb[0].mxu0
    %314 = vmatprep.mubr.bf16.mxu0 0
    %315 = vmatmul.mubr.bf16.gmra.mrb[0].mxu0 %v244
    %v316 = vpop.f32.mrb[0].mxu0
    %v317 = vadd.f32 %v219, %v316
    %v318 = vpop.f32.mrb[0].mxu0
    %v319 = vpop.f32.mrb[0].mxu0
    %v320 = vadd.f32 %v219, %v319
    %v321 = vpop.f32.mrb[0].mxu0
    %322 = vmatprep.mubr.bf16.mxu0 0
    %323 = vmatmul.mubr.bf16.gmra.mrb[0].mxu0 %v247
    %v324 = vpop.f32.mrb[0].mxu0
    %v325 = vadd.f32 %v219, %v324
    %v326 = vpop.f32.mrb[0].mxu0
    %v327 = vpop.f32.mrb[0].mxu0
    %v328 = vadd.f32 %v219, %v327
    %v329 = vpop.f32.mrb[0].mxu0
    %330 = vmatprep.mubr.bf16.mxu0 0
    %331 = vmatmul.mubr.bf16.gmra.mrb[0].mxu0 %v250
    %v332 = vpop.f32.mrb[0].mxu0
    %v333 = vadd.f32 %v219, %v332
    %v334 = vpop.f32.mrb[0].mxu0
    %v335 = vpop.f32.mrb[0].mxu0
    %v336 = vadd.f32 %v219, %v335
    %v337 = vpop.f32.mrb[0].mxu0
    %338 = vmatprep.mubr.bf16.mxu0 0
    %339 = vmatmul.mubr.bf16.gmra.mrb[0].mxu0 %v253
    %v340 = vpop.f32.mrb[0].mxu0
    %v341 = vadd.f32 %v219, %v340
    %v342 = vpop.f32.mrb[0].mxu0
    %v343 = vpop.f32.mrb[0].mxu0
    %v344 = vadd.f32 %v219, %v343
    %v345 = vpop.f32.mrb[0].mxu0
    %346 = vmatprep.mubr.bf16.mxu0 0
    %347 = vmatmul.mubr.bf16.gmra.mrb[0].mxu0 %v256
    %v348 = vpop.f32.mrb[0].mxu0
    %v349 = vadd.f32 %v219, %v348
    %v350 = vpop.f32.mrb[0].mxu0
    %v351 = vpop.f32.mrb[0].mxu0
    %v352 = vadd.f32 %v219, %v351
    %v353 = vpop.f32.mrb[0].mxu0
    %354 = vdwg.mxu0
    %v355 = vmax.f32 %v293, 0.0
    %v356 = vmax.f32 %v296, 0.0
    %v357 = vmax.f32 %v301, 0.0
    %v358 = vmax.f32 %v304, 0.0
    %v359 = vmax.f32 %v309, 0.0
    %v360 = vmax.f32 %v312, 0.0
    %v361 = vmax.f32 %v317, 0.0
    %v362 = vmax.f32 %v320, 0.0
    %v363 = vmax.f32 %v325, 0.0
    %v364 = vmax.f32 %v328, 0.0
    %v365 = vmax.f32 %v333, 0.0
    %v366 = vmax.f32 %v336, 0.0
    %v367 = vmax.f32 %v341, 0.0
    %v368 = vmax.f32 %v344, 0.0
    %v369 = vmax.f32 %v349, 0.0
    %v370 = vmax.f32 %v352, 0.0
    %v371 = vpack.c.bf16 %v356, %v355
    %v372 = vpack.c.bf16 %v358, %v357
    %v373 = vpack.c.bf16 %v360, %v359
    %v374 = vpack.c.bf16 %v362, %v361
    %v375 = vpack.c.bf16 %v364, %v363
    %v376 = vpack.c.bf16 %v366, %v365
    %v377 = vpack.c.bf16 %v368, %v367
    %v378 = vpack.c.bf16 %v370, %v369
    %v379 = vld [vmem:[%s6] sm:$0xf]
    %v380 = vld [vmem:[%s6 + $0x4] sm:$0xf]
    %v381 = vld [vmem:[%s6 + $0x8] sm:$0xf]
    %v382 = vld [vmem:[%s6 + $0xc] sm:$0xf]
    %v383 = vld [vmem:[%s7] sm:$0x1]
    %v385 = vlaneseq
    %v386 = vshrl.u32 %v385, 7
    %v387 = vsub.s32 0, %v386
    %v388 = vrot.slane %v383, %v387
    %v394 = vunpack.c.l.b16 %v379
    %v395 = vunpack.c.l.b16 %v380
    %v396 = vunpack.c.l.b16 %v381
    %v397 = vunpack.c.l.b16 %v382
    %v398 = vpack.c.b16 %v395, %v394
    %v399 = vpack.c.b16 %v397, %v396
    %v403 = vsel %vm233, %v371, 0
    %v406 = vsel %vm233, %v372, 0
    %v409 = vsel %vm233, %v373, 0
    %v412 = vsel %vm233, %v374, 0
    %v415 = vsel %vm233, %v375, 0
    %v418 = vsel %vm233, %v376, 0
    %v421 = vsel %vm233, %v377, 0
    %v424 = vsel %vm233, %v378, 0
    %426 = vmatprep.subr.bf16.mxu0 0
    %427 = vmatpush1.bf16.msra.mxu0 %v398
    %428 = vmatprep.subr.bf16.mxu0 0
    %429 = vmatpush1.bf16.msra.mxu0 %v399
    %430 = vmatprep.subr.bf16.mxu0 0
    %431 = vmatpush1.bf16.msra.mxu0 0
    %432 = vmatprep.subr.bf16.mxu0 0
    %433 = vmatpush1.bf16.msra.mxu0 0
    %434 = vmatprep.subr.bf16.mxu0 0
    %435 = vmatpush1.bf16.msra.mxu0 0
    %436 = vmatprep.subr.bf16.mxu0 0
    %437 = vmatpush1.bf16.msra.mxu0 0
    %438 = vmatprep.subr.bf16.mxu0 0
    %439 = vmatpush1.bf16.msra.mxu0 0
    %440 = vmatprep.subr.bf16.mxu0 0
    %441 = vmatpush1.bf16.msra.mxu0 0
    %442 = vmatprep.subr.bf16.mxu0 0
    %443 = vmatpush1.bf16.msra.mxu0 0
    %444 = vmatprep.subr.bf16.mxu0 0
    %445 = vmatpush1.bf16.msra.mxu0 0
    %446 = vmatprep.subr.bf16.mxu0 0
    %447 = vmatpush1.bf16.msra.mxu0 0
    %448 = vmatprep.subr.bf16.mxu0 0
    %449 = vmatpush1.bf16.msra.mxu0 0
    %450 = vmatprep.subr.bf16.mxu0 0
    %451 = vmatpush1.bf16.msra.mxu0 0
    %452 = vmatprep.subr.bf16.mxu0 0
    %453 = vmatpush1.bf16.msra.mxu0 0
    %454 = vmatprep.subr.bf16.mxu0 0
    %455 = vmatpush1.bf16.msra.mxu0 0
    %456 = vmatprep.subr.bf16.mxu0 0
    %457 = vmatpush1.bf16.msra.mxu0 0
    %458 = vmatprep.mubr.bf16.mxu0 0
    %459 = vmatmul.mubr.bf16.gmra.mrb[0].mxu0 %v403
    %v460 = vpop.f32.mrb[0].mxu0
    %v461 = vadd.f32 %v388, %v460
    %v462 = vpop.f32.mrb[0].mxu0
    %v463 = vpop.f32.mrb[0].mxu0
    %v464 = vadd.f32 %v388, %v463
    %v465 = vpop.f32.mrb[0].mxu0
    %466 = vmatprep.mubr.bf16.mxu0 0
    %467 = vmatmul.mubr.bf16.gmra.mrb[0].mxu0 %v406
    %v468 = vpop.f32.mrb[0].mxu0
    %v469 = vadd.f32 %v388, %v468
    %v470 = vpop.f32.mrb[0].mxu0
    %v471 = vpop.f32.mrb[0].mxu0
    %v472 = vadd.f32 %v388, %v471
    %v473 = vpop.f32.mrb[0].mxu0
    %474 = vmatprep.mubr.bf16.mxu0 0
    %475 = vmatmul.mubr.bf16.gmra.mrb[0].mxu0 %v409
    %v476 = vpop.f32.mrb[0].mxu0
    %v477 = vadd.f32 %v388, %v476
    %v478 = vpop.f32.mrb[0].mxu0
    %v479 = vpop.f32.mrb[0].mxu0
    %v480 = vadd.f32 %v388, %v479
    %v481 = vpop.f32.mrb[0].mxu0
    %482 = vmatprep.mubr.bf16.mxu0 0
    %483 = vmatmul.mubr.bf16.gmra.mrb[0].mxu0 %v412
    %v484 = vpop.f32.mrb[0].mxu0
    %v485 = vadd.f32 %v388, %v484
    %v486 = vpop.f32.mrb[0].mxu0
    %v487 = vpop.f32.mrb[0].mxu0
    %v488 = vadd.f32 %v388, %v487
    %v489 = vpop.f32.mrb[0].mxu0
    %490 = vmatprep.mubr.bf16.mxu0 0
    %491 = vmatmul.mubr.bf16.gmra.mrb[0].mxu0 %v415
    %v492 = vpop.f32.mrb[0].mxu0
    %v493 = vadd.f32 %v388, %v492
    %v494 = vpop.f32.mrb[0].mxu0
    %v495 = vpop.f32.mrb[0].mxu0
    %v496 = vadd.f32 %v388, %v495
    %v497 = vpop.f32.mrb[0].mxu0
    %498 = vmatprep.mubr.bf16.mxu0 0
    %499 = vmatmul.mubr.bf16.gmra.mrb[0].mxu0 %v418
    %v500 = vpop.f32.mrb[0].mxu0
    %v501 = vadd.f32 %v388, %v500
    %v502 = vpop.f32.mrb[0].mxu0
    %v503 = vpop.f32.mrb[0].mxu0
    %v504 = vadd.f32 %v388, %v503
    %v505 = vpop.f32.mrb[0].mxu0
    %506 = vmatprep.mubr.bf16.mxu0 0
    %507 = vmatmul.mubr.bf16.gmra.mrb[0].mxu0 %v421
    %v508 = vpop.f32.mrb[0].mxu0
    %v509 = vadd.f32 %v388, %v508
    %v510 = vpop.f32.mrb[0].mxu0
    %v511 = vpop.f32.mrb[0].mxu0
    %v512 = vadd.f32 %v388, %v511
    %v513 = vpop.f32.mrb[0].mxu0
    %514 = vmatprep.mubr.bf16.mxu0 0
    %515 = vmatmul.mubr.bf16.gmra.mrb[0].mxu0 %v424
    %v516 = vpop.f32.mrb[0].mxu0
    %v517 = vadd.f32 %v388, %v516
    %v518 = vpop.f32.mrb[0].mxu0
    %v519 = vpop.f32.mrb[0].mxu0
    %v520 = vadd.f32 %v388, %v519
    %v521 = vpop.f32.mrb[0].mxu0
    %522 = vdwg.mxu0
    %v523 = vmax.f32 %v461, 0.0
    %v524 = vmax.f32 %v464, 0.0
    %v525 = vmax.f32 %v469, 0.0
    %v526 = vmax.f32 %v472, 0.0
    %v527 = vmax.f32 %v477, 0.0
    %v528 = vmax.f32 %v480, 0.0
    %v529 = vmax.f32 %v485, 0.0
    %v530 = vmax.f32 %v488, 0.0
    %v531 = vmax.f32 %v493, 0.0
    %v532 = vmax.f32 %v496, 0.0
    %v533 = vmax.f32 %v501, 0.0
    %v534 = vmax.f32 %v504, 0.0
    %v535 = vmax.f32 %v509, 0.0
    %v536 = vmax.f32 %v512, 0.0
    %v537 = vmax.f32 %v517, 0.0
    %v538 = vmax.f32 %v520, 0.0
    %v539 = vld [vmem:[#allocation2] sm:$0xff]
    %v540 = vlaneseq
    %v541 = vshrl.u32 %v540, 7
    %v542 = vsub.s32 0, %v541
    %v543 = vrot.slane %v539, %v542
    %545 = vbcast.lane.b32.xlu0 %v543, 256
    %v546 = vpop.permute.xlu0 %545
    %s548 = sor.u32 256, 8
    %549 = vbcast.lane.b32.xlu0 %v543, %s548
    %v550 = vpop.permute.xlu0 %549
    %v551 = vlaneseq
    %v552 = vshrl.u32 %v551, 7
    %v553 = vsub.s32 1, %v552
    %v554 = vrot.slane %v539, %v553
    %556 = vbcast.lane.b32.xlu0 %v554, 256
    %v557 = vpop.permute.xlu0 %556
    %s559 = sor.u32 256, 8
    %560 = vbcast.lane.b32.xlu0 %v554, %s559
    %v561 = vpop.permute.xlu0 %560
    %v562 = vlaneseq
    %v563 = vshrl.u32 %v562, 7
    %v564 = vsub.s32 2, %v563
    %v565 = vrot.slane %v539, %v564
    %567 = vbcast.lane.b32.xlu0 %v565, 256
    %v568 = vpop.permute.xlu0 %567
    %s570 = sor.u32 256, 8
    %571 = vbcast.lane.b32.xlu0 %v565, %s570
    %v572 = vpop.permute.xlu0 %571
    %v573 = vlaneseq
    %v574 = vshrl.u32 %v573, 7
    %v575 = vsub.s32 3, %v574
    %v576 = vrot.slane %v539, %v575
    %578 = vbcast.lane.b32.xlu0 %v576, 256
    %v579 = vpop.permute.xlu0 %578
    %s581 = sor.u32 256, 8
    %582 = vbcast.lane.b32.xlu0 %v576, %s581
    %v583 = vpop.permute.xlu0 %582
    %v584 = vlaneseq
    %v585 = vshrl.u32 %v584, 7
    %v586 = vsub.s32 4, %v585
    %v587 = vrot.slane %v539, %v586
    %589 = vbcast.lane.b32.xlu0 %v587, 256
    %v590 = vpop.permute.xlu0 %589
    %s592 = sor.u32 256, 8
    %593 = vbcast.lane.b32.xlu0 %v587, %s592
    %v594 = vpop.permute.xlu0 %593
    %v595 = vlaneseq
    %v596 = vshrl.u32 %v595, 7
    %v597 = vsub.s32 5, %v596
    %v598 = vrot.slane %v539, %v597
    %600 = vbcast.lane.b32.xlu0 %v598, 256
    %v601 = vpop.permute.xlu0 %600
    %s603 = sor.u32 256, 8
    %604 = vbcast.lane.b32.xlu0 %v598, %s603
    %v605 = vpop.permute.xlu0 %604
    %v606 = vlaneseq
    %v607 = vshrl.u32 %v606, 7
    %v608 = vsub.s32 6, %v607
    %v609 = vrot.slane %v539, %v608
    %611 = vbcast.lane.b32.xlu0 %v609, 256
    %v612 = vpop.permute.xlu0 %611
    %s614 = sor.u32 256, 8
    %615 = vbcast.lane.b32.xlu0 %v609, %s614
    %v616 = vpop.permute.xlu0 %615
    %v617 = vlaneseq
    %v618 = vshrl.u32 %v617, 7
    %v619 = vsub.s32 7, %v618
    %v620 = vrot.slane %v539, %v619
    %622 = vbcast.lane.b32.xlu0 %v620, 256
    %v623 = vpop.permute.xlu0 %622
    %s625 = sor.u32 256, 8
    %626 = vbcast.lane.b32.xlu0 %v620, %s625
    %v627 = vpop.permute.xlu0 %626
    %v628 = vmul.f32 %v523, %v546
    %v629 = vmul.f32 %v524, %v550
    %v630 = vmul.f32 %v525, %v557
    %v631 = vmul.f32 %v526, %v561
    %v632 = vmul.f32 %v527, %v568
    %v633 = vmul.f32 %v528, %v572
    %v634 = vmul.f32 %v529, %v579
    %v635 = vmul.f32 %v530, %v583
    %v636 = vmul.f32 %v531, %v590
    %v637 = vmul.f32 %v532, %v594
    %v638 = vmul.f32 %v533, %v601
    %v639 = vmul.f32 %v534, %v605
    %v640 = vmul.f32 %v535, %v612
    %v641 = vmul.f32 %v536, %v616
    %v642 = vmul.f32 %v537, %v623
    %v643 = vmul.f32 %v538, %v627
    %vm644 = vcmask 523264
    %v645 = vsel %vm644, %v628, 0.0
    %v646 = vsel %vm644, %v629, 0.0
    %v647 = vadd.f32 %v645, %v646
    %v648 = vrot.slane %v647, 4
    %v649 = vadd.f32 %v647, %v648
    %v650 = vrot.slane %v649, 2
    %v651 = vadd.f32 %v649, %v650
    %v652 = vrot.slane %v651, 1
    %v653 = vadd.f32 %v651, %v652
    %v654 = vsel %vm644, %v630, 0.0
    %v655 = vsel %vm644, %v631, 0.0
    %v656 = vadd.f32 %v654, %v655
    %v657 = vrot.slane %v656, 4
    %v658 = vadd.f32 %v656, %v657
    %v659 = vrot.slane %v658, 2
    %v660 = vadd.f32 %v658, %v659
    %v661 = vrot.slane %v660, 1
    %v662 = vadd.f32 %v660, %v661
    %v663 = vsel %vm644, %v632, 0.0
    %v664 = vsel %vm644, %v633, 0.0
    %v665 = vadd.f32 %v663, %v664
    %v666 = vrot.slane %v665, 4
    %v667 = vadd.f32 %v665, %v666
    %v668 = vrot.slane %v667, 2
    %v669 = vadd.f32 %v667, %v668
    %v670 = vrot.slane %v669, 1
    %v671 = vadd.f32 %v669, %v670
    %v672 = vsel %vm644, %v634, 0.0
    %v673 = vsel %vm644, %v635, 0.0
    %v674 = vadd.f32 %v672, %v673
    %v675 = vrot.slane %v674, 4
    %v676 = vadd.f32 %v674, %v675
    %v677 = vrot.slane %v676, 2
    %v678 = vadd.f32 %v676, %v677
    %v679 = vrot.slane %v678, 1
    %v680 = vadd.f32 %v678, %v679
    %v681 = vsel %vm644, %v636, 0.0
    %v682 = vsel %vm644, %v637, 0.0
    %v683 = vadd.f32 %v681, %v682
    %v684 = vrot.slane %v683, 4
    %v685 = vadd.f32 %v683, %v684
    %v686 = vrot.slane %v685, 2
    %v687 = vadd.f32 %v685, %v686
    %v688 = vrot.slane %v687, 1
    %v689 = vadd.f32 %v687, %v688
    %v690 = vsel %vm644, %v638, 0.0
    %v691 = vsel %vm644, %v639, 0.0
    %v692 = vadd.f32 %v690, %v691
    %v693 = vrot.slane %v692, 4
    %v694 = vadd.f32 %v692, %v693
    %v695 = vrot.slane %v694, 2
    %v696 = vadd.f32 %v694, %v695
    %v697 = vrot.slane %v696, 1
    %v698 = vadd.f32 %v696, %v697
    %v699 = vsel %vm644, %v640, 0.0
    %v700 = vsel %vm644, %v641, 0.0
    %v701 = vadd.f32 %v699, %v700
    %v702 = vrot.slane %v701, 4
    %v703 = vadd.f32 %v701, %v702
    %v704 = vrot.slane %v703, 2
    %v705 = vadd.f32 %v703, %v704
    %v706 = vrot.slane %v705, 1
    %v707 = vadd.f32 %v705, %v706
    %v708 = vsel %vm644, %v642, 0.0
    %v709 = vsel %vm644, %v643, 0.0
    %v710 = vadd.f32 %v708, %v709
    %v711 = vrot.slane %v710, 4
    %v712 = vadd.f32 %v710, %v711
    %v713 = vrot.slane %v712, 2
    %v714 = vadd.f32 %v712, %v713
    %v715 = vrot.slane %v714, 1
    %v716 = vadd.f32 %v714, %v715
    %v717 = vpack.c.bf16 %v653, %v653
    %v718 = vpack.c.bf16 %v662, %v662
    %v719 = vpack.c.bf16 %v671, %v671
    %v720 = vpack.c.bf16 %v680, %v680
    %v721 = vpack.c.bf16 %v689, %v689
    %v722 = vpack.c.bf16 %v698, %v698
    %v723 = vpack.c.bf16 %v707, %v707
    %v724 = vpack.c.bf16 %v716, %v716
    %v725 = vld [vmem:[%s8] sm:$0xf]
    %v726 = vld [vmem:[%s8 + $0x4] sm:$0xf]
    %v727 = vld [vmem:[%s8 + $0x8] sm:$0xf]
    %v728 = vld [vmem:[%s8 + $0xc] sm:$0xf]
    %v729 = vld [vmem:[%s8 + $0x10] sm:$0xf]
    %v730 = vld [vmem:[%s8 + $0x14] sm:$0xf]
    %v731 = vld [vmem:[%s8 + $0x18] sm:$0xf]
    %v732 = vld [vmem:[%s8 + $0x1c] sm:$0xf]
    %v733 = vld [vmem:[%s9] sm:$0x1]
    %v735 = vlaneseq
    %v736 = vshrl.u32 %v735, 7
    %v737 = vsub.s32 0, %v736
    %v738 = vrot.slane %v733, %v737
    %v748 = vunpack.c.l.b16 %v717
    %v749 = vunpack.c.l.b16 %v718
    %v750 = vunpack.c.l.b16 %v719
    %v751 = vunpack.c.l.b16 %v720
    %v752 = vunpack.c.l.b16 %v721
    %v753 = vunpack.c.l.b16 %v722
    %v754 = vunpack.c.l.b16 %v723
    %v755 = vunpack.c.l.b16 %v724
    %vm756 = vcmask 1041409
    %v757 = vsel %vm756, %v749, %v748
    %vm758 = vcmask 1042434
    %v759 = vsel %vm758, %v750, %v757
    %vm760 = vcmask 1043459
    %v761 = vsel %vm760, %v751, %v759
    %vm762 = vcmask 1044484
    %v763 = vsel %vm762, %v752, %v761
    %vm764 = vcmask 1045509
    %v765 = vsel %vm764, %v753, %v763
    %vm766 = vcmask 1046534
    %v767 = vsel %vm766, %v754, %v765
    %vm768 = vcmask 1047559
    %v769 = vsel %vm768, %v755, %v767
    %v770 = vpack.c.b16 %v769, %v769
    %v779 = vunpack.c.l.b16 %v725
    %v780 = vunpack.c.l.b16 %v726
    %v781 = vunpack.c.l.b16 %v727
    %v782 = vunpack.c.l.b16 %v728
    %v783 = vunpack.c.l.b16 %v729
    %v784 = vunpack.c.l.b16 %v730
    %v785 = vunpack.c.l.b16 %v731
    %v786 = vunpack.c.l.b16 %v732
    %v787 = vpack.c.b16 %v780, %v779
    %v788 = vpack.c.b16 %v782, %v781
    %v789 = vpack.c.b16 %v784, %v783
    %v790 = vpack.c.b16 %v786, %v785
    %v796 = vsel %vm644, %v770, 0
    %798 = vmatprep.subr.bf16.mxu0 0
    %799 = vmatpush1.bf16.msra.mxu0 %v787
    %800 = vmatprep.subr.bf16.mxu0 0
    %801 = vmatpush1.bf16.msra.mxu0 %v788
    %802 = vmatprep.subr.bf16.mxu0 0
    %803 = vmatpush1.bf16.msra.mxu0 %v789
    %804 = vmatprep.subr.bf16.mxu0 0
    %805 = vmatpush1.bf16.msra.mxu0 %v790
    %806 = vmatprep.subr.bf16.mxu0 0
    %807 = vmatpush1.bf16.msra.mxu0 0
    %808 = vmatprep.subr.bf16.mxu0 0
    %809 = vmatpush1.bf16.msra.mxu0 0
    %810 = vmatprep.subr.bf16.mxu0 0
    %811 = vmatpush1.bf16.msra.mxu0 0
    %812 = vmatprep.subr.bf16.mxu0 0
    %813 = vmatpush1.bf16.msra.mxu0 0
    %814 = vmatprep.subr.bf16.mxu0 0
    %815 = vmatpush1.bf16.msra.mxu0 0
    %816 = vmatprep.subr.bf16.mxu0 0
    %817 = vmatpush1.bf16.msra.mxu0 0
    %818 = vmatprep.subr.bf16.mxu0 0
    %819 = vmatpush1.bf16.msra.mxu0 0
    %820 = vmatprep.subr.bf16.mxu0 0
    %821 = vmatpush1.bf16.msra.mxu0 0
    %822 = vmatprep.subr.bf16.mxu0 0
    %823 = vmatpush1.bf16.msra.mxu0 0
    %824 = vmatprep.subr.bf16.mxu0 0
    %825 = vmatpush1.bf16.msra.mxu0 0
    %826 = vmatprep.subr.bf16.mxu0 0
    %827 = vmatpush1.bf16.msra.mxu0 0
    %828 = vmatprep.subr.bf16.mxu0 0
    %829 = vmatpush1.bf16.msra.mxu0 0
    %830 = vmatprep.mubr.bf16.mxu0 0
    %831 = vmatmul.mubr.bf16.gmra.mrb[0].mxu0 %v796
    %v832 = vpop.f32.mrb[0].mxu0
    %v833 = vadd.f32 %v738, %v832
    %v834 = vpop.f32.mrb[0].mxu0
    %v835 = vpop.f32.mrb[0].mxu0
    %v836 = vpop.f32.mrb[0].mxu0
    %837 = vdwg.mxu0
    %v838 = vmax.f32 %v833, 0.0
    %v839 = vpack.c.bf16 %v838, %v838
    %v840 = vld [vmem:[%s10] sm:$0xf]
    %v841 = vld [vmem:[%s10 + $0x4] sm:$0xf]
    %v842 = vld [vmem:[%s10 + $0x8] sm:$0xf]
    %v843 = vld [vmem:[%s10 + $0xc] sm:$0xf]
    %v844 = vld [vmem:[%s11] sm:$0x1]
    %v846 = vlaneseq
    %v847 = vshrl.u32 %v846, 7
    %v848 = vsub.s32 0, %v847
    %v849 = vrot.slane %v844, %v848
    %v855 = vunpack.c.l.b16 %v840
    %v856 = vunpack.c.l.b16 %v841
    %v857 = vunpack.c.l.b16 %v842
    %v858 = vunpack.c.l.b16 %v843
    %v859 = vpack.c.b16 %v856, %v855
    %v860 = vpack.c.b16 %v858, %v857
    %v864 = vsel %vm233, %v839, 0
    %866 = vmatprep.subr.bf16.mxu0 0
    %867 = vmatpush1.bf16.msra.mxu0 %v859
    %868 = vmatprep.subr.bf16.mxu0 0
    %869 = vmatpush1.bf16.msra.mxu0 %v860
    %870 = vmatprep.subr.bf16.mxu0 0
    %871 = vmatpush1.bf16.msra.mxu0 0
    %872 = vmatprep.subr.bf16.mxu0 0
    %873 = vmatpush1.bf16.msra.mxu0 0
    %874 = vmatprep.subr.bf16.mxu0 0
    %875 = vmatpush1.bf16.msra.mxu0 0
    %876 = vmatprep.subr.bf16.mxu0 0
    %877 = vmatpush1.bf16.msra.mxu0 0
    %878 = vmatprep.subr.bf16.mxu0 0
    %879 = vmatpush1.bf16.msra.mxu0 0
    %880 = vmatprep.subr.bf16.mxu0 0
    %881 = vmatpush1.bf16.msra.mxu0 0
    %882 = vmatprep.subr.bf16.mxu0 0
    %883 = vmatpush1.bf16.msra.mxu0 0
    %884 = vmatprep.subr.bf16.mxu0 0
    %885 = vmatpush1.bf16.msra.mxu0 0
    %886 = vmatprep.subr.bf16.mxu0 0
    %887 = vmatpush1.bf16.msra.mxu0 0
    %888 = vmatprep.subr.bf16.mxu0 0
    %889 = vmatpush1.bf16.msra.mxu0 0
    %890 = vmatprep.subr.bf16.mxu0 0
    %891 = vmatpush1.bf16.msra.mxu0 0
    %892 = vmatprep.subr.bf16.mxu0 0
    %893 = vmatpush1.bf16.msra.mxu0 0
    %894 = vmatprep.subr.bf16.mxu0 0
    %895 = vmatpush1.bf16.msra.mxu0 0
    %896 = vmatprep.subr.bf16.mxu0 0
    %897 = vmatpush1.bf16.msra.mxu0 0
    %898 = vmatprep.mubr.bf16.mxu0 0
    %899 = vmatmul.mubr.bf16.gmra.mrb[0].mxu0 %v864
    %v900 = vpop.f32.mrb[0].mxu0
    %v901 = vadd.f32 %v849, %v900
    %v902 = vpop.f32.mrb[0].mxu0
    %v903 = vpop.f32.mrb[0].mxu0
    %v904 = vpop.f32.mrb[0].mxu0
    %905 = vdwg.mxu0
    %v906 = vmax.f32 %v901, 0.0
    %v907 = vpack.c.bf16 %v906, %v906
    %v908 = vld [vmem:[%s12] sm:$0xf]
    %v909 = vld [vmem:[%s12 + $0x4] sm:$0xf]
    %v910 = vld [vmem:[%s12 + $0x8] sm:$0xf]
    %v911 = vld [vmem:[%s12 + $0xc] sm:$0xf]
    %v912 = vld [vmem:[%s13] sm:$0x1]
    %v914 = vlaneseq
    %v915 = vshrl.u32 %v914, 7
    %v916 = vsub.s32 0, %v915
    %v917 = vrot.slane %v912, %v916
    %v923 = vunpack.c.l.b16 %v908
    %v924 = vunpack.c.l.b16 %v909
    %v925 = vunpack.c.l.b16 %v910
    %v926 = vunpack.c.l.b16 %v911
    %v927 = vpack.c.b16 %v924, %v923
    %v928 = vpack.c.b16 %v926, %v925
    %v932 = vsel %vm233, %v907, 0
    %934 = vmatprep.subr.bf16.mxu0 0
    %935 = vmatpush1.bf16.msra.mxu0 %v927
    %936 = vmatprep.subr.bf16.mxu0 0
    %937 = vmatpush1.bf16.msra.mxu0 %v928
    %938 = vmatprep.subr.bf16.mxu0 0
    %939 = vmatpush1.bf16.msra.mxu0 0
    %940 = vmatprep.subr.bf16.mxu0 0
    %941 = vmatpush1.bf16.msra.mxu0 0
    %942 = vmatprep.subr.bf16.mxu0 0
    %943 = vmatpush1.bf16.msra.mxu0 0
    %944 = vmatprep.subr.bf16.mxu0 0
    %945 = vmatpush1.bf16.msra.mxu0 0
    %946 = vmatprep.subr.bf16.mxu0 0
    %947 = vmatpush1.bf16.msra.mxu0 0
    %948 = vmatprep.subr.bf16.mxu0 0
    %949 = vmatpush1.bf16.msra.mxu0 0
    %950 = vmatprep.subr.bf16.mxu0 0
    %951 = vmatpush1.bf16.msra.mxu0 0
    %952 = vmatprep.subr.bf16.mxu0 0
    %953 = vmatpush1.bf16.msra.mxu0 0
    %954 = vmatprep.subr.bf16.mxu0 0
    %955 = vmatpush1.bf16.msra.mxu0 0
    %956 = vmatprep.subr.bf16.mxu0 0
    %957 = vmatpush1.bf16.msra.mxu0 0
    %958 = vmatprep.subr.bf16.mxu0 0
    %959 = vmatpush1.bf16.msra.mxu0 0
    %960 = vmatprep.subr.bf16.mxu0 0
    %961 = vmatpush1.bf16.msra.mxu0 0
    %962 = vmatprep.subr.bf16.mxu0 0
    %963 = vmatpush1.bf16.msra.mxu0 0
    %964 = vmatprep.subr.bf16.mxu0 0
    %965 = vmatpush1.bf16.msra.mxu0 0
    %966 = vmatprep.mubr.bf16.mxu0 0
    %967 = vmatmul.mubr.bf16.gmra.mrb[0].mxu0 %v932
    %v968 = vpop.f32.mrb[0].mxu0
    %v969 = vadd.f32 %v917, %v968
    %v970 = vpop.f32.mrb[0].mxu0
    %v971 = vpop.f32.mrb[0].mxu0
    %v972 = vpop.f32.mrb[0].mxu0
    %973 = vdwg.mxu0
    %v974 = vmax.f32 %v969, 0.0
    %v975 = vpack.c.bf16 %v974, %v974
    %v976 = vld [vmem:[%s14] sm:$0xf]
    %v977 = vld [vmem:[%s14 + $0x4] sm:$0xf]
    %v978 = vld [vmem:[%s14 + $0x8] sm:$0xf]
    %v979 = vld [vmem:[%s14 + $0xc] sm:$0xf]
    %v980 = vld [vmem:[%s15] sm:$0x1]
    %v982 = vlaneseq
    %v983 = vshrl.u32 %v982, 7
    %v984 = vsub.s32 0, %v983
    %v985 = vrot.slane %v980, %v984
    %v991 = vunpack.c.l.b16 %v976
    %v992 = vunpack.c.l.b16 %v977
    %v993 = vunpack.c.l.b16 %v978
    %v994 = vunpack.c.l.b16 %v979
    %v995 = vpack.c.b16 %v992, %v991
    %v996 = vpack.c.b16 %v994, %v993
    %v1000 = vsel %vm233, %v975, 0
    %1002 = vmatprep.subr.bf16.mxu0 0
    %1003 = vmatpush1.bf16.msra.mxu0 %v995
    %1004 = vmatprep.subr.bf16.mxu0 0
    %1005 = vmatpush1.bf16.msra.mxu0 %v996
    %1006 = vmatprep.subr.bf16.mxu0 0
    %1007 = vmatpush1.bf16.msra.mxu0 0
    %1008 = vmatprep.subr.bf16.mxu0 0
    %1009 = vmatpush1.bf16.msra.mxu0 0
    %1010 = vmatprep.subr.bf16.mxu0 0
    %1011 = vmatpush1.bf16.msra.mxu0 0
    %1012 = vmatprep.subr.bf16.mxu0 0
    %1013 = vmatpush1.bf16.msra.mxu0 0
    %1014 = vmatprep.subr.bf16.mxu0 0
    %1015 = vmatpush1.bf16.msra.mxu0 0
    %1016 = vmatprep.subr.bf16.mxu0 0
    %1017 = vmatpush1.bf16.msra.mxu0 0
    %1018 = vmatprep.subr.bf16.mxu0 0
    %1019 = vmatpush1.bf16.msra.mxu0 0
    %1020 = vmatprep.subr.bf16.mxu0 0
    %1021 = vmatpush1.bf16.msra.mxu0 0
    %1022 = vmatprep.subr.bf16.mxu0 0
    %1023 = vmatpush1.bf16.msra.mxu0 0
    %1024 = vmatprep.subr.bf16.mxu0 0
    %1025 = vmatpush1.bf16.msra.mxu0 0
    %1026 = vmatprep.subr.bf16.mxu0 0
    %1027 = vmatpush1.bf16.msra.mxu0 0
    %1028 = vmatprep.subr.bf16.mxu0 0
    %1029 = vmatpush1.bf16.msra.mxu0 0
    %1030 = vmatprep.subr.bf16.mxu0 0
    %1031 = vmatpush1.bf16.msra.mxu0 0
    %1032 = vmatprep.subr.bf16.mxu0 0
    %1033 = vmatpush1.bf16.msra.mxu0 0
    %1034 = vmatprep.mubr.bf16.mxu0 0
    %1035 = vmatmul.mubr.bf16.gmra.mrb[0].mxu0 %v1000
    %v1036 = vpop.f32.mrb[0].mxu0
    %v1037 = vadd.f32 %v985, %v1036
    %v1038 = vpop.f32.mrb[0].mxu0
    %v1039 = vpop.f32.mrb[0].mxu0
    %v1040 = vpop.f32.mrb[0].mxu0
    %1041 = vdwg.mxu0
    %1042 = vst [vmem:[#allocation5] sm:$0xff] %v1037
    // Predicated region
    $region70: #{tpu_custom_call.1} parent=1 // pred_check
      _
    $region71: #{tpu_custom_call.1} parent=1 // pred_check_branch
      %1044 = sbr.rel (0) target = $region73
    $region72: #{tpu_custom_call.1} parent=1 // pred_region
      %s1046 = ssub.s32 128, 128
      %1047 = vsyncadd [#allocation4], %s1046
      %s1049 = sshll.u32 [#allocation5], 4
      %s1050 = int_to_ptr.vmem [resolvable:$true] %s1049
      %1052 = dma.vmem_to_hbm [thread:$0]  %s1050, 128, %s16, [#allocation4]
    $region73: #{tpu_custom_call.1} parent=1 // pred_fallthru
      _
    // Predicated region
    $region74: #{tpu_custom_call.1} parent=1 // pred_check
      _
    $region75: #{tpu_custom_call.1} parent=1 // pred_check_branch
      %1054 = sbr.rel (0) target = $region77
    $region76: #{tpu_custom_call.1} parent=1 // pred_region
      %1055 = dma.done [#allocation4], 128
    $region77: #{tpu_custom_call.1} parent=1 // pred_fallthru
      _
    %1056 = vsyncpa [#allocation3], 1
    %1057 = vsyncpa [#allocation4], 1

</llo_original>
